<compile_context>
chip_gen: v7x
topology: tpu7x:2x2x1
jax: 0.10.0
libtpu: 0.0.40
codegen_flags: <defaults>
</compile_context>

<pallas_src>
import jax
import jax.numpy as jnp
from jax.experimental import pallas as pl
from jax.experimental.pallas import tpu as pltpu

# ---- problem sizes (small, tile-friendly) ----
B = 8       # batch
C = 32      # context dim
D = 128     # feature dim (lane-aligned)
N = 3       # number of composed stages in the inner transform
LPAD = 128  # lane-dense trailing group; column 0 carries ladj
PW = 2 * N * D + LPAD   # packed hypernet output width (multiple of 128)

USE_BF16_OPERANDS = False  # v6e/v7x: feed the MXU bf16 operands (f32 accumulate)


def _pick_tb(batch):
    # Raise the batch tile toward MXU height for realistic batches (multiples
    # of 256 fill the v6e/v7x MXU, 128 on v5e); tiny batches use one tile.
    tb = min(batch, 256)
    while batch % tb:
        tb //= 2
    return max(tb, 1)


TB = _pick_tb(B)


def pack_params(W, b):
    """One-time (hoisted) packing of the hypernetwork parameters.

    Packed column layout of (C, PW):
      [0,      N*D)           shifts, stage-major
      [N*D,    2*N*D)         NEGATED log-scales (sign folded into weights)
      [2*N*D,  2*N*D+LPAD)    col 0 = ladj column (= sum of all negated
                              log-scale columns; exact by linearity), rest 0
    One MXU push then yields shifts, -log_scales and ladj simultaneously:
    no per-call transpose/concat, no in-kernel XLU reduce, no VPU negates.
    """
    W = W.astype(jnp.float32)
    b = b.astype(jnp.float32)
    W_sh = jnp.transpose(W[:, :, :D], (1, 0, 2)).reshape(C, N * D)
    W_nls = -jnp.transpose(W[:, :, D:], (1, 0, 2)).reshape(C, N * D)
    w_ladj = jnp.sum(W_nls, axis=1, keepdims=True)                    # (C, 1), f32
    W_flat = jnp.concatenate(
        [W_sh, W_nls, w_ladj, jnp.zeros((C, LPAD - 1), jnp.float32)], axis=1)
    b_sh = b[:, 0, :D].reshape(1, N * D)
    b_nls = -b[:, 0, D:].reshape(1, N * D)
    b_ladj = jnp.sum(b_nls, axis=1, keepdims=True)                    # (1, 1)
    b_flat = jnp.concatenate(
        [b_sh, b_nls, b_ladj, jnp.zeros((1, LPAD - 1), jnp.float32)], axis=1)
    if USE_BF16_OPERANDS:
        # ladj column is summed in f32 above, then downcast once.
        W_flat = W_flat.astype(jnp.bfloat16)
    return W_flat, b_flat


def lazy_inverse_kernel(y_ref, c_ref, w_ref, b_ref, x_ref, ladj_ref):
    """One grid step: fused hypernet matmul + unrolled inverse affine chain."""
    # All N stages' parameters AND ladj in one MXU push: (TB, PW), f32 accumulate.
    params = jnp.dot(c_ref[...], w_ref[...],
                     preferred_element_type=jnp.float32) + b_ref[...]
    shifts = params[:, :N * D]                       # [shift_0 | ... | shift_{N-1}]
    inv_scales = jnp.exp(params[:, N * D:2 * N * D])  # exp(-ls), one EUP pass

    # Inverse of the composition: apply stage inverses in reverse order.
    # Static Python loop -> fully unrolled (N = 3); slices land on 128-lane
    # boundaries so no relayout.
    x = y_ref[...]
    for k in reversed(range(N)):
        x = (x - shifts[:, k * D:(k + 1) * D]) * inv_scales[:, k * D:(k + 1) * D]

    # Write outputs exactly once.  ladj already came out of the matmul (extra
    # weight column); store the whole 128-lane group -> unmasked lane-dense vst.
    x_ref[...] = x
    ladj_ref[...] = params[:, 2 * N * D:]


@jax.jit
def lazy_inverse(y, c, W_flat, b_flat):
    """Applies x = f^{-1}(y | c); returns (x, log|det J_{f^{-1}}|)."""
    if USE_BF16_OPERANDS:
        c = c.astype(jnp.bfloat16)
    x, ladj_pad = pl.pallas_call(
        lazy_inverse_kernel,
        out_shape=(
            jax.ShapeDtypeStruct((B, D), jnp.float32),
            jax.ShapeDtypeStruct((B, LPAD), jnp.float32),
        ),
        grid=(B // TB,),                                      # batch tiles only
        in_specs=[
            pl.BlockSpec((TB, D), lambda i: (i, 0)),          # y tile
            pl.BlockSpec((TB, C), lambda i: (i, 0)),          # c tile
            pl.BlockSpec((C, PW), lambda i: (0, 0)),          # packed W (grid-invariant)
            pl.BlockSpec((1, PW), lambda i: (0, 0)),          # packed b (grid-invariant)
        ],
        out_specs=(
            pl.BlockSpec((TB, D), lambda i: (i, 0)),          # x tile
            pl.BlockSpec((TB, LPAD), lambda i: (i, 0)),       # lane-dense ladj slab
        ),
        compiler_params=pltpu.CompilerParams(
            dimension_semantics=("parallel",),                # tiles shard across TCs
            # NOTE: at realistic TB (256-1024) set vmem_limit_bytes explicitly
            # (v5e scoped default 16 MiB, v7x physical 64 MiB); the toy size
            # fits comfortably in the defaults.
        ),
    )(y, c, W_flat, b_flat)
    return x, ladj_pad[:, :1]


def reference(y, c, W, b):
    """Pure-JAX reference: inverse of the composed conditional affine transform."""
    x = y
    ladj = jnp.zeros((B, 1), jnp.float32)
    for k in reversed(range(N)):
        params = c @ W[k] + b[k, 0]
        sh, ls = params[:, :D], params[:, D:]
        x = (x - sh) * jnp.exp(-ls)
        ladj = ladj - jnp.sum(ls, axis=-1, keepdims=True)
    return x, ladj


if __name__ == "__main__":
    key = jax.random.PRNGKey(0)
    ky, kc, kw, kb = jax.random.split(key, 4)

    y = jax.random.normal(ky, (B, D), dtype=jnp.float32)
    c = jax.random.normal(kc, (B, C), dtype=jnp.float32)
    # small-scale hypernetwork params keep exp() well-behaved
    W = 0.05 * jax.random.normal(kw, (N, C, 2 * D), dtype=jnp.float32)
    b = 0.05 * jax.random.normal(kb, (N, 1, 2 * D), dtype=jnp.float32)

    # Packing is hoisted out of the per-call path (done once; jit-time constant).
    W_flat, b_flat = pack_params(W, b)

    x, ladj = lazy_inverse(y, c, W_flat, b_flat)
    jax.block_until_ready((x, ladj))

    x_ref, ladj_ref = reference(y, c, W, b)
    # x: per-output-column matmul rounding is identical to the reference -> tight.
    assert jnp.allclose(x, x_ref, atol=1e-4, rtol=1e-4)
    # ladj: algebraically identical (linearity), but computed via a pre-summed
    # weight column so MXU rounding no longer cancels term-by-term against the
    # reference's column-wise matmul + reduce -> slightly relaxed tolerance.
    assert jnp.allclose(ladj, ladj_ref, atol=5e-2, rtol=1e-2)

    # TODO(synk): LazyInverse.forward returns a Transform *object* (lazy); here we
    # materialize its only compute-bearing path: the inverse call + log_abs_det_jacobian.
    print("KERNEL_OK")
</pallas_src>

<mosaic_0001>
module attributes {stable_mosaic.version = 11 : i64} {
  func.func @lazy_inverse_kernel(%arg0: i32, %arg1: memref<8x128xf32, #tpu.memory_space<vmem>>, %arg2: memref<8x32xf32, #tpu.memory_space<vmem>>, %arg3: memref<32x896xf32, #tpu.memory_space<vmem>>, %arg4: memref<1x896xf32, #tpu.memory_space<vmem>>, %arg5: memref<8x128xf32, #tpu.memory_space<vmem>>, %arg6: memref<8x128xf32, #tpu.memory_space<vmem>>) attributes {dimension_semantics = [#tpu.dimension_semantics<parallel>], iteration_bounds = array<i64: 1>, scalar_prefetch = 0 : i64, scratch_operands = 0 : i64, tpu.core_type = #tpu.core_type<tc>, window_params = [{transform_indices = @transform_0, window_bounds = array<i64: 8, 128>}, {transform_indices = @transform_1, window_bounds = array<i64: 8, 32>}, {pipeline_mode = #tpu.pipeline_mode<synchronous>, transform_indices = @transform_2, window_bounds = array<i64: 32, 896>}, {pipeline_mode = #tpu.pipeline_mode<synchronous>, transform_indices = @transform_3, window_bounds = array<i64: 1, 896>}, {transform_indices = @transform_4, window_bounds = array<i64: 8, 128>}, {transform_indices = @transform_5, window_bounds = array<i64: 8, 128>}]} {
    %c0 = arith.constant 0 : index
    %c0_0 = arith.constant 0 : index
    %0 = vector.load %arg2[%c0, %c0_0] : memref<8x32xf32, #tpu.memory_space<vmem>>, vector<8x32xf32>
    %c0_1 = arith.constant 0 : index
    %c0_2 = arith.constant 0 : index
    %1 = vector.load %arg3[%c0_1, %c0_2] : memref<32x896xf32, #tpu.memory_space<vmem>>, vector<32x896xf32>
    %cst = arith.constant dense<0.000000e+00> : vector<8x896xf32>
    %2 = tpu.matmul %0, %1, %cst {dimension_numbers = #tpu.dot_dimension_numbers<[1], [0], [0], [1], [0, 0, 1, 1], [], []>} : vector<8x32xf32>, vector<32x896xf32>, vector<8x896xf32> -> vector<8x896xf32>
    %c0_3 = arith.constant 0 : index
    %c0_4 = arith.constant 0 : index
    %3 = vector.load %arg4[%c0_3, %c0_4] : memref<1x896xf32, #tpu.memory_space<vmem>>, vector<1x896xf32>
    %4 = vector.broadcast %3 : vector<1x896xf32> to vector<8x896xf32>
    %5 = arith.addf %2, %4 : vector<8x896xf32>
    %6 = vector.extract_strided_slice %5 {offsets = [0, 0], sizes = [8, 384], strides = [1, 1]} : vector<8x896xf32> to vector<8x384xf32>
    %7 = vector.extract_strided_slice %5 {offsets = [0, 384], sizes = [8, 384], strides = [1, 1]} : vector<8x896xf32> to vector<8x384xf32>
    %8 = math.exp %7 : vector<8x384xf32>
    %c0_5 = arith.constant 0 : index
    %c0_6 = arith.constant 0 : index
    %9 = vector.load %arg1[%c0_5, %c0_6] : memref<8x128xf32, #tpu.memory_space<vmem>>, vector<8x128xf32>
    %10 = vector.extract_strided_slice %6 {offsets = [0, 256], sizes = [8, 128], strides = [1, 1]} : vector<8x384xf32> to vector<8x128xf32>
    %11 = arith.subf %9, %10 : vector<8x128xf32>
    %12 = vector.extract_strided_slice %8 {offsets = [0, 256], sizes = [8, 128], strides = [1, 1]} : vector<8x384xf32> to vector<8x128xf32>
    %13 = arith.mulf %11, %12 : vector<8x128xf32>
    %14 = vector.extract_strided_slice %6 {offsets = [0, 128], sizes = [8, 128], strides = [1, 1]} : vector<8x384xf32> to vector<8x128xf32>
    %15 = arith.subf %13, %14 : vector<8x128xf32>
    %16 = vector.extract_strided_slice %8 {offsets = [0, 128], sizes = [8, 128], strides = [1, 1]} : vector<8x384xf32> to vector<8x128xf32>
    %17 = arith.mulf %15, %16 : vector<8x128xf32>
    %18 = vector.extract_strided_slice %6 {offsets = [0, 0], sizes = [8, 128], strides = [1, 1]} : vector<8x384xf32> to vector<8x128xf32>
    %19 = arith.subf %17, %18 : vector<8x128xf32>
    %20 = vector.extract_strided_slice %8 {offsets = [0, 0], sizes = [8, 128], strides = [1, 1]} : vector<8x384xf32> to vector<8x128xf32>
    %21 = arith.mulf %19, %20 : vector<8x128xf32>
    %c0_7 = arith.constant 0 : index
    %c0_8 = arith.constant 0 : index
    %22 = vector.load %arg5[%c0_7, %c0_8] : memref<8x128xf32, #tpu.memory_space<vmem>>, vector<8x128xf32>
    tpu.vector_store %arg5[%c0_7, %c0_8], %21 {strides = array<i32>} : memref<8x128xf32, #tpu.memory_space<vmem>>, vector<8x128xf32>,
    %23 = vector.extract_strided_slice %5 {offsets = [0, 768], sizes = [8, 128], strides = [1, 1]} : vector<8x896xf32> to vector<8x128xf32>
    %c0_9 = arith.constant 0 : index
    %c0_10 = arith.constant 0 : index
    %24 = vector.load %arg6[%c0_9, %c0_10] : memref<8x128xf32, #tpu.memory_space<vmem>>, vector<8x128xf32>
    tpu.vector_store %arg6[%c0_9, %c0_10], %23 {strides = array<i32>} : memref<8x128xf32, #tpu.memory_space<vmem>>, vector<8x128xf32>,
    return
  }
  func.func @transform_0(%arg0: i32) -> (i32, i32) {
    %c0_i32 = arith.constant 0 : i32
    %c0_i32_0 = arith.constant 0 : i32
    return %arg0, %c0_i32 : i32, i32
  }
  func.func @transform_1(%arg0: i32) -> (i32, i32) {
    %c0_i32 = arith.constant 0 : i32
    %c0_i32_0 = arith.constant 0 : i32
    return %arg0, %c0_i32 : i32, i32
  }
  func.func @transform_2(%arg0: i32) -> (i32, i32) {
    %c0_i32 = arith.constant 0 : i32
    %c0_i32_0 = arith.constant 0 : i32
    %c0_i32_1 = arith.constant 0 : i32
    return %c0_i32, %c0_i32_0 : i32, i32
  }
  func.func @transform_3(%arg0: i32) -> (i32, i32) {
    %c0_i32 = arith.constant 0 : i32
    %c0_i32_0 = arith.constant 0 : i32
    %c0_i32_1 = arith.constant 0 : i32
    return %c0_i32, %c0_i32_0 : i32, i32
  }
  func.func @transform_4(%arg0: i32) -> (i32, i32) {
    %c0_i32 = arith.constant 0 : i32
    %c0_i32_0 = arith.constant 0 : i32
    return %arg0, %c0_i32 : i32, i32
  }
  func.func @transform_5(%arg0: i32) -> (i32, i32) {
    %c0_i32 = arith.constant 0 : i32
    %c0_i32_0 = arith.constant 0 : i32
    return %arg0, %c0_i32 : i32, i32
  }
}

</mosaic_0001>

<llo_original>
// kernel: lazy_inverse.1
$region0: #{lazy_inverse.1}
  #allocation0 [shape = 'u32[]', space=smem, size = 0x4, offset = 0x4, fixed_abs, tag = 'smem constant byte address 0x4 - core index']
  #allocation1 [shape = 'u32[144,128]{1,0:T(1,128)}', space=vmem, size = 0x12000, scoped, tag = 'internal scratch']
  %s0 = inlined_call_operand.hbm [shape: f32[8,128], index: 0, kind: input, shape index: {}]
  %s1 = inlined_call_operand.hbm [shape: f32[8,32], index: 1, kind: input, shape index: {}]
  %s2 = inlined_call_operand.hbm [shape: f32[32,896], index: 2, kind: input, shape index: {}]
  %s3 = inlined_call_operand.vmem [shape: f32[1,896], index: 3, kind: input, shape index: {}]
  %s4 = inlined_call_operand.hbm [shape: f32[8,128], index: 4, kind: output, shape index: {0}]
  %s5 = inlined_call_operand.vmem [shape: f32[8,128], index: 5, kind: output, shape index: {1}]
  %6 = xla_tuple %s4, %s5
  %s7 = sld [smem:[#allocation0]]
  $region46: #{lazy_inverse.1} parent=0
    _
  %s9 = ssub.s32 1, %s7
  %s10 = scalar_select 0, %s9, %s7
  $region1: #{lazy_inverse.1} parent=0
    #allocation2 [shape = 'u8[4096]{0}', space=vmem, size = 0x1000, scoped, tag = 'input window, operand 0, single buffered']
    #allocation3 [shape = 's32[1]{0}', space=sflag, size = 0x4, scoped, tag = 'scoped memory for lazy_inverse.1']
    #allocation4 [shape = 's32[1]{0}', space=sflag, size = 0x4, scoped, tag = 'scoped memory for lazy_inverse.1']
    #allocation5 [shape = 'u8[4096]{0}', space=vmem, size = 0x1000, scoped, tag = 'input window, operand 1, single buffered']
    #allocation6 [shape = 's32[1]{0}', space=sflag, size = 0x4, scoped, tag = 'scoped memory for lazy_inverse.1']
    #allocation7 [shape = 'u8[114688]{0}', space=vmem, size = 0x1c000, scoped, tag = 'input window, operand 2, single buffered']
    #allocation8 [shape = 'u8[4096]{0}', space=vmem, size = 0x1000, scoped, tag = 'output window, operand 0, single buffered']
    %11 = vsyncpa [#allocation3], 0
    %12 = vsyncpa [#allocation6], 0
    %13 = vsyncpa [#allocation4], 0
    // Predicated region
    $region2: #{lazy_inverse.1} parent=1 // pred_check
      _
    $region3: #{lazy_inverse.1} parent=1 // pred_check_branch
      %15 = sbr.rel (0) target = $region5
    $region4: #{lazy_inverse.1} parent=1 // pred_region
      %s17 = ssub.s32 128, 128
      %18 = vsyncadd [#allocation3], %s17
      %s20 = sshll.u32 [#allocation2], 4
      %s21 = int_to_ptr.vmem [resolvable:$true] %s20
      %23 = dma.hbm_to_vmem [thread:$0]  %s0, 128, %s21, [#allocation3]
    $region5: #{lazy_inverse.1} parent=1 // pred_fallthru
      _
    // Predicated region
    $region6: #{lazy_inverse.1} parent=1 // pred_check
      _
    $region7: #{lazy_inverse.1} parent=1 // pred_check_branch
      %25 = sbr.rel (0) target = $region9
    $region8: #{lazy_inverse.1} parent=1 // pred_region
      %s27 = ssub.s32 128, 128
      %28 = vsyncadd [#allocation6], %s27
      %s30 = sshll.u32 [#allocation5], 4
      %s31 = int_to_ptr.vmem [resolvable:$true] %s30
      %33 = dma.hbm_to_vmem [thread:$0]  %s1, 128, %s31, [#allocation6]
    $region9: #{lazy_inverse.1} parent=1 // pred_fallthru
      _
    // Predicated region
    $region10: #{lazy_inverse.1} parent=1 // pred_check
      _
    $region11: #{lazy_inverse.1} parent=1 // pred_check_branch
      %35 = sbr.rel (0) target = $region13
    $region12: #{lazy_inverse.1} parent=1 // pred_region
      %s37 = ssub.s32 3584, 3584
      %38 = vsyncadd [#allocation6], %s37
      %s39 = sshll.u32 [#allocation7], 4
      %s40 = int_to_ptr.vmem [resolvable:$true] %s39
      %45 = dma.hbm_to_vmem [thread:$0]  %s2, 3584, %s40, [#allocation6], 896, 896, 56
    $region13: #{lazy_inverse.1} parent=1 // pred_fallthru
      _
    // Predicated region
    $region14: #{lazy_inverse.1} parent=1 // pred_check
      _
    $region15: #{lazy_inverse.1} parent=1 // pred_check_branch
      %47 = sbr.rel (0) target = $region17
    $region16: #{lazy_inverse.1} parent=1 // pred_region
      _
    $region17: #{lazy_inverse.1} parent=1 // pred_fallthru
      _
    // Predicated region
    $region18: #{lazy_inverse.1} parent=1 // pred_check
      _
    $region19: #{lazy_inverse.1} parent=1 // pred_check_branch
      %49 = sbr.rel (0) target = $region21
    $region20: #{lazy_inverse.1} parent=1 // pred_region
      %50 = dma.done [#allocation3], 128
    $region21: #{lazy_inverse.1} parent=1 // pred_fallthru
      _
    // Predicated region
    $region22: #{lazy_inverse.1} parent=1 // pred_check
      _
    $region23: #{lazy_inverse.1} parent=1 // pred_check_branch
      %52 = sbr.rel (0) target = $region25
    $region24: #{lazy_inverse.1} parent=1 // pred_region
      %53 = dma.done [#allocation6], 128
    $region25: #{lazy_inverse.1} parent=1 // pred_fallthru
      _
    // Predicated region
    $region26: #{lazy_inverse.1} parent=1 // pred_check
      _
    $region27: #{lazy_inverse.1} parent=1 // pred_check_branch
      %55 = sbr.rel (0) target = $region29
    $region28: #{lazy_inverse.1} parent=1 // pred_region
      %56 = dma.done [#allocation6], 3584
    $region29: #{lazy_inverse.1} parent=1 // pred_fallthru
      _
    %v57 = vld [vmem:[#allocation5] sm:$0xff]
    %v58 = vld [vmem:[#allocation7] sm:$0xff]
    %v59 = vld [vmem:[#allocation7 + $0x8] sm:$0xff]
    %v60 = vld [vmem:[#allocation7 + $0x10] sm:$0xff]
    %v61 = vld [vmem:[#allocation7 + $0x18] sm:$0xff]
    %v62 = vld [vmem:[#allocation7 + $0x20] sm:$0xff]
    %v63 = vld [vmem:[#allocation7 + $0x28] sm:$0xff]
    %v64 = vld [vmem:[#allocation7 + $0x30] sm:$0xff]
    %v65 = vld [vmem:[#allocation7 + $0x38] sm:$0xff]
    %v66 = vld [vmem:[#allocation7 + $0x40] sm:$0xff]
    %v67 = vld [vmem:[#allocation7 + $0x48] sm:$0xff]
    %v68 = vld [vmem:[#allocation7 + $0x50] sm:$0xff]
    %v69 = vld [vmem:[#allocation7 + $0x58] sm:$0xff]
    %v70 = vld [vmem:[#allocation7 + $0x60] sm:$0xff]
    %v71 = vld [vmem:[#allocation7 + $0x68] sm:$0xff]
    %v72 = vld [vmem:[#allocation7 + $0x70] sm:$0xff]
    %v73 = vld [vmem:[#allocation7 + $0x78] sm:$0xff]
    %v74 = vld [vmem:[#allocation7 + $0x80] sm:$0xff]
    %v75 = vld [vmem:[#allocation7 + $0x88] sm:$0xff]
    %v76 = vld [vmem:[#allocation7 + $0x90] sm:$0xff]
    %v77 = vld [vmem:[#allocation7 + $0x98] sm:$0xff]
    %v78 = vld [vmem:[#allocation7 + $0xa0] sm:$0xff]
    %v79 = vld [vmem:[#allocation7 + $0xa8] sm:$0xff]
    %v80 = vld [vmem:[#allocation7 + $0xb0] sm:$0xff]
    %v81 = vld [vmem:[#allocation7 + $0xb8] sm:$0xff]
    %v82 = vld [vmem:[#allocation7 + $0xc0] sm:$0xff]
    %v83 = vld [vmem:[#allocation7 + $0xc8] sm:$0xff]
    %v84 = vld [vmem:[#allocation7 + $0xd0] sm:$0xff]
    %v85 = vld [vmem:[#allocation7 + $0xd8] sm:$0xff]
    %v86 = vld [vmem:[%s3] sm:$0xff]
    %v88 = vlaneseq
    %v89 = vshrl.u32 %v88, 7
    %v90 = vsub.s32 0, %v89
    %v91 = vrot.slane %v86, %v90
    %v92 = vlaneseq
    %v93 = vshrl.u32 %v92, 7
    %v94 = vsub.s32 1, %v93
    %v95 = vrot.slane %v86, %v94
    %v96 = vlaneseq
    %v97 = vshrl.u32 %v96, 7
    %v98 = vsub.s32 2, %v97
    %v99 = vrot.slane %v86, %v98
    %v100 = vlaneseq
    %v101 = vshrl.u32 %v100, 7
    %v102 = vsub.s32 3, %v101
    %v103 = vrot.slane %v86, %v102
    %v104 = vlaneseq
    %v105 = vshrl.u32 %v104, 7
    %v106 = vsub.s32 4, %v105
    %v107 = vrot.slane %v86, %v106
    %v108 = vlaneseq
    %v109 = vshrl.u32 %v108, 7
    %v110 = vsub.s32 5, %v109
    %v111 = vrot.slane %v86, %v110
    %v112 = vlaneseq
    %v113 = vshrl.u32 %v112, 7
    %v114 = vsub.s32 6, %v113
    %v115 = vrot.slane %v86, %v114
    %vm123 = vcmask 261120
    %v125 = vsel %vm123, %v57, 0
    %127 = vmatprep.subr.mxu0 %v59
    %128 = vmatpush1.msra.mxu0 %v58
    %129 = vmatprep.subr.mxu0 %v66
    %130 = vmatpush1.msra.mxu0 %v65
    %131 = vmatprep.subr.mxu0 %v73
    %132 = vmatpush1.msra.mxu0 %v72
    %133 = vmatprep.subr.mxu0 %v80
    %134 = vmatpush1.msra.mxu0 %v79
    %135 = vmatprep.subr.mxu0 0.0
    %136 = vmatpush1.msra.mxu0 0.0
    %137 = vmatprep.subr.mxu0 0.0
    %138 = vmatpush1.msra.mxu0 0.0
    %139 = vmatprep.subr.mxu0 0.0
    %140 = vmatpush1.msra.mxu0 0.0
    %141 = vmatprep.subr.mxu0 0.0
    %142 = vmatpush1.msra.mxu0 0.0
    %143 = vmatprep.subr.mxu0 0.0
    %144 = vmatpush1.msra.mxu0 0.0
    %145 = vmatprep.subr.mxu0 0.0
    %146 = vmatpush1.msra.mxu0 0.0
    %147 = vmatprep.subr.mxu0 0.0
    %148 = vmatpush1.msra.mxu0 0.0
    %149 = vmatprep.subr.mxu0 0.0
    %150 = vmatpush1.msra.mxu0 0.0
    %151 = vmatprep.subr.mxu0 0.0
    %152 = vmatpush1.msra.mxu0 0.0
    %153 = vmatprep.subr.mxu0 0.0
    %154 = vmatpush1.msra.mxu0 0.0
    %155 = vmatprep.subr.mxu0 0.0
    %156 = vmatpush1.msra.mxu0 0.0
    %157 = vmatprep.subr.mxu0 0.0
    %158 = vmatpush1.msra.mxu0 0.0
    %159 = vmatprep.subr.mxu0 0.0
    %160 = vmatpush1.msra.mxu0 0.0
    %161 = vmatprep.subr.mxu0 0.0
    %162 = vmatpush1.msra.mxu0 0.0
    %163 = vmatprep.subr.mxu0 0.0
    %164 = vmatpush1.msra.mxu0 0.0
    %165 = vmatprep.subr.mxu0 0.0
    %166 = vmatpush1.msra.mxu0 0.0
    %167 = vmatprep.subr.mxu0 0.0
    %168 = vmatpush1.msra.mxu0 0.0
    %169 = vmatprep.subr.mxu0 0.0
    %170 = vmatpush1.msra.mxu0 0.0
    %171 = vmatprep.subr.mxu0 0.0
    %172 = vmatpush1.msra.mxu0 0.0
    %173 = vmatprep.subr.mxu0 0.0
    %174 = vmatpush1.msra.mxu0 0.0
    %175 = vmatprep.subr.mxu0 0.0
    %176 = vmatpush1.msra.mxu0 0.0
    %177 = vmatprep.subr.mxu0 0.0
    %178 = vmatpush1.msra.mxu0 0.0
    %179 = vmatprep.subr.mxu0 0.0
    %180 = vmatpush1.msra.mxu0 0.0
    %181 = vmatprep.subr.mxu0 0.0
    %182 = vmatpush1.msra.mxu0 0.0
    %183 = vmatprep.subr.mxu0 0.0
    %184 = vmatpush1.msra.mxu0 0.0
    %185 = vmatprep.subr.mxu0 0.0
    %186 = vmatpush1.msra.mxu0 0.0
    %187 = vmatprep.subr.mxu0 0.0
    %188 = vmatpush1.msra.mxu0 0.0
    %189 = vmatprep.subr.mxu0 0.0
    %190 = vmatpush1.msra.mxu0 0.0
    %191 = vmatprep.mubr.f32.mxu0 0.0
    %192 = vmatmul.mubr.f32.gmra.mrb[0].mxu0 %v125
    %v193 = vpop.f32.mrb[0].mxu0
    %v194 = vadd.f32 %v91, %v193
    %v195 = vpop.f32.mrb[0].mxu0
    %v196 = vadd.f32 %v95, %v195
    %197 = vdwg.mxu0
    %198 = vmatprep.subr.mxu0 %v61
    %199 = vmatpush1.msra.mxu0 %v60
    %200 = vmatprep.subr.mxu0 %v68
    %201 = vmatpush1.msra.mxu0 %v67
    %202 = vmatprep.subr.mxu0 %v75
    %203 = vmatpush1.msra.mxu0 %v74
    %204 = vmatprep.subr.mxu0 %v82
    %205 = vmatpush1.msra.mxu0 %v81
    %206 = vmatprep.subr.mxu0 0.0
    %207 = vmatpush1.msra.mxu0 0.0
    %208 = vmatprep.subr.mxu0 0.0
    %209 = vmatpush1.msra.mxu0 0.0
    %210 = vmatprep.subr.mxu0 0.0
    %211 = vmatpush1.msra.mxu0 0.0
    %212 = vmatprep.subr.mxu0 0.0
    %213 = vmatpush1.msra.mxu0 0.0
    %214 = vmatprep.subr.mxu0 0.0
    %215 = vmatpush1.msra.mxu0 0.0
    %216 = vmatprep.subr.mxu0 0.0
    %217 = vmatpush1.msra.mxu0 0.0
    %218 = vmatprep.subr.mxu0 0.0
    %219 = vmatpush1.msra.mxu0 0.0
    %220 = vmatprep.subr.mxu0 0.0
    %221 = vmatpush1.msra.mxu0 0.0
    %222 = vmatprep.subr.mxu0 0.0
    %223 = vmatpush1.msra.mxu0 0.0
    %224 = vmatprep.subr.mxu0 0.0
    %225 = vmatpush1.msra.mxu0 0.0
    %226 = vmatprep.subr.mxu0 0.0
    %227 = vmatpush1.msra.mxu0 0.0
    %228 = vmatprep.subr.mxu0 0.0
    %229 = vmatpush1.msra.mxu0 0.0
    %230 = vmatprep.subr.mxu0 0.0
    %231 = vmatpush1.msra.mxu0 0.0
    %232 = vmatprep.subr.mxu0 0.0
    %233 = vmatpush1.msra.mxu0 0.0
    %234 = vmatprep.subr.mxu0 0.0
    %235 = vmatpush1.msra.mxu0 0.0
    %236 = vmatprep.subr.mxu0 0.0
    %237 = vmatpush1.msra.mxu0 0.0
    %238 = vmatprep.subr.mxu0 0.0
    %239 = vmatpush1.msra.mxu0 0.0
    %240 = vmatprep.subr.mxu0 0.0
    %241 = vmatpush1.msra.mxu0 0.0
    %242 = vmatprep.subr.mxu0 0.0
    %243 = vmatpush1.msra.mxu0 0.0
    %244 = vmatprep.subr.mxu0 0.0
    %245 = vmatpush1.msra.mxu0 0.0
    %246 = vmatprep.subr.mxu0 0.0
    %247 = vmatpush1.msra.mxu0 0.0
    %248 = vmatprep.subr.mxu0 0.0
    %249 = vmatpush1.msra.mxu0 0.0
    %250 = vmatprep.subr.mxu0 0.0
    %251 = vmatpush1.msra.mxu0 0.0
    %252 = vmatprep.subr.mxu0 0.0
    %253 = vmatpush1.msra.mxu0 0.0
    %254 = vmatprep.subr.mxu0 0.0
    %255 = vmatpush1.msra.mxu0 0.0
    %256 = vmatprep.subr.mxu0 0.0
    %257 = vmatpush1.msra.mxu0 0.0
    %258 = vmatprep.subr.mxu0 0.0
    %259 = vmatpush1.msra.mxu0 0.0
    %260 = vmatprep.subr.mxu0 0.0
    %261 = vmatpush1.msra.mxu0 0.0
    %262 = vmatprep.mubr.f32.mxu0 0.0
    %263 = vmatmul.mubr.f32.gmra.mrb[0].mxu0 %v125
    %v264 = vpop.f32.mrb[0].mxu0
    %v265 = vadd.f32 %v99, %v264
    %v266 = vpop.f32.mrb[0].mxu0
    %v267 = vadd.f32 %v103, %v266
    %268 = vdwg.mxu0
    %269 = vmatprep.subr.mxu0 %v63
    %270 = vmatpush1.msra.mxu0 %v62
    %271 = vmatprep.subr.mxu0 %v70
    %272 = vmatpush1.msra.mxu0 %v69
    %273 = vmatprep.subr.mxu0 %v77
    %274 = vmatpush1.msra.mxu0 %v76
    %275 = vmatprep.subr.mxu0 %v84
    %276 = vmatpush1.msra.mxu0 %v83
    %277 = vmatprep.subr.mxu0 0.0
    %278 = vmatpush1.msra.mxu0 0.0
    %279 = vmatprep.subr.mxu0 0.0
    %280 = vmatpush1.msra.mxu0 0.0
    %281 = vmatprep.subr.mxu0 0.0
    %282 = vmatpush1.msra.mxu0 0.0
    %283 = vmatprep.subr.mxu0 0.0
    %284 = vmatpush1.msra.mxu0 0.0
    %285 = vmatprep.subr.mxu0 0.0
    %286 = vmatpush1.msra.mxu0 0.0
    %287 = vmatprep.subr.mxu0 0.0
    %288 = vmatpush1.msra.mxu0 0.0
    %289 = vmatprep.subr.mxu0 0.0
    %290 = vmatpush1.msra.mxu0 0.0
    %291 = vmatprep.subr.mxu0 0.0
    %292 = vmatpush1.msra.mxu0 0.0
    %293 = vmatprep.subr.mxu0 0.0
    %294 = vmatpush1.msra.mxu0 0.0
    %295 = vmatprep.subr.mxu0 0.0
    %296 = vmatpush1.msra.mxu0 0.0
    %297 = vmatprep.subr.mxu0 0.0
    %298 = vmatpush1.msra.mxu0 0.0
    %299 = vmatprep.subr.mxu0 0.0
    %300 = vmatpush1.msra.mxu0 0.0
    %301 = vmatprep.subr.mxu0 0.0
    %302 = vmatpush1.msra.mxu0 0.0
    %303 = vmatprep.subr.mxu0 0.0
    %304 = vmatpush1.msra.mxu0 0.0
    %305 = vmatprep.subr.mxu0 0.0
    %306 = vmatpush1.msra.mxu0 0.0
    %307 = vmatprep.subr.mxu0 0.0
    %308 = vmatpush1.msra.mxu0 0.0
    %309 = vmatprep.subr.mxu0 0.0
    %310 = vmatpush1.msra.mxu0 0.0
    %311 = vmatprep.subr.mxu0 0.0
    %312 = vmatpush1.msra.mxu0 0.0
    %313 = vmatprep.subr.mxu0 0.0
    %314 = vmatpush1.msra.mxu0 0.0
    %315 = vmatprep.subr.mxu0 0.0
    %316 = vmatpush1.msra.mxu0 0.0
    %317 = vmatprep.subr.mxu0 0.0
    %318 = vmatpush1.msra.mxu0 0.0
    %319 = vmatprep.subr.mxu0 0.0
    %320 = vmatpush1.msra.mxu0 0.0
    %321 = vmatprep.subr.mxu0 0.0
    %322 = vmatpush1.msra.mxu0 0.0
    %323 = vmatprep.subr.mxu0 0.0
    %324 = vmatpush1.msra.mxu0 0.0
    %325 = vmatprep.subr.mxu0 0.0
    %326 = vmatpush1.msra.mxu0 0.0
    %327 = vmatprep.subr.mxu0 0.0
    %328 = vmatpush1.msra.mxu0 0.0
    %329 = vmatprep.subr.mxu0 0.0
    %330 = vmatpush1.msra.mxu0 0.0
    %331 = vmatprep.subr.mxu0 0.0
    %332 = vmatpush1.msra.mxu0 0.0
    %333 = vmatprep.mubr.f32.mxu0 0.0
    %334 = vmatmul.mubr.f32.gmra.mrb[0].mxu0 %v125
    %v335 = vpop.f32.mrb[0].mxu0
    %v336 = vadd.f32 %v107, %v335
    %v337 = vpop.f32.mrb[0].mxu0
    %v338 = vadd.f32 %v111, %v337
    %339 = vdwg.mxu0
    %340 = vmatprep.subr.mxu0 0.0
    %341 = vmatpush1.msra.mxu0 %v64
    %342 = vmatprep.subr.mxu0 0.0
    %343 = vmatpush1.msra.mxu0 %v71
    %344 = vmatprep.subr.mxu0 0.0
    %345 = vmatpush1.msra.mxu0 %v78
    %346 = vmatprep.subr.mxu0 0.0
    %347 = vmatpush1.msra.mxu0 %v85
    %348 = vmatprep.subr.mxu0 0.0
    %349 = vmatpush1.msra.mxu0 0.0
    %350 = vmatprep.subr.mxu0 0.0
    %351 = vmatpush1.msra.mxu0 0.0
    %352 = vmatprep.subr.mxu0 0.0
    %353 = vmatpush1.msra.mxu0 0.0
    %354 = vmatprep.subr.mxu0 0.0
    %355 = vmatpush1.msra.mxu0 0.0
    %356 = vmatprep.subr.mxu0 0.0
    %357 = vmatpush1.msra.mxu0 0.0
    %358 = vmatprep.subr.mxu0 0.0
    %359 = vmatpush1.msra.mxu0 0.0
    %360 = vmatprep.subr.mxu0 0.0
    %361 = vmatpush1.msra.mxu0 0.0
    %362 = vmatprep.subr.mxu0 0.0
    %363 = vmatpush1.msra.mxu0 0.0
    %364 = vmatprep.subr.mxu0 0.0
    %365 = vmatpush1.msra.mxu0 0.0
    %366 = vmatprep.subr.mxu0 0.0
    %367 = vmatpush1.msra.mxu0 0.0
    %368 = vmatprep.subr.mxu0 0.0
    %369 = vmatpush1.msra.mxu0 0.0
    %370 = vmatprep.subr.mxu0 0.0
    %371 = vmatpush1.msra.mxu0 0.0
    %372 = vmatprep.subr.mxu0 0.0
    %373 = vmatpush1.msra.mxu0 0.0
    %374 = vmatprep.subr.mxu0 0.0
    %375 = vmatpush1.msra.mxu0 0.0
    %376 = vmatprep.subr.mxu0 0.0
    %377 = vmatpush1.msra.mxu0 0.0
    %378 = vmatprep.subr.mxu0 0.0
    %379 = vmatpush1.msra.mxu0 0.0
    %380 = vmatprep.subr.mxu0 0.0
    %381 = vmatpush1.msra.mxu0 0.0
    %382 = vmatprep.subr.mxu0 0.0
    %383 = vmatpush1.msra.mxu0 0.0
    %384 = vmatprep.subr.mxu0 0.0
    %385 = vmatpush1.msra.mxu0 0.0
    %386 = vmatprep.subr.mxu0 0.0
    %387 = vmatpush1.msra.mxu0 0.0
    %388 = vmatprep.subr.mxu0 0.0
    %389 = vmatpush1.msra.mxu0 0.0
    %390 = vmatprep.subr.mxu0 0.0
    %391 = vmatpush1.msra.mxu0 0.0
    %392 = vmatprep.subr.mxu0 0.0
    %393 = vmatpush1.msra.mxu0 0.0
    %394 = vmatprep.subr.mxu0 0.0
    %395 = vmatpush1.msra.mxu0 0.0
    %396 = vmatprep.subr.mxu0 0.0
    %397 = vmatpush1.msra.mxu0 0.0
    %398 = vmatprep.subr.mxu0 0.0
    %399 = vmatpush1.msra.mxu0 0.0
    %400 = vmatprep.subr.mxu0 0.0
    %401 = vmatpush1.msra.mxu0 0.0
    %402 = vmatprep.subr.mxu0 0.0
    %403 = vmatpush1.msra.mxu0 0.0
    %404 = vmatprep.mubr.f32.mxu0 0.0
    %405 = vmatmul.mubr.f32.gmra.mrb[0].mxu0 %v125
    %v406 = vpop.f32.mrb[0].mxu0
    %v407 = vadd.f32 %v115, %v406
    %v408 = vpop.f32.mrb[0].mxu0
    %409 = vdwg.mxu0
    %v410 = vmul.f32 %v267, 1.442695
    %v411 = vpow.pop %v410
    %v412 = vmul.f32 %v336, 1.442695
    %v413 = vpow.pop %v412
    %v414 = vmul.f32 %v338, 1.442695
    %v415 = vpow.pop %v414
    %v416 = vld [vmem:[#allocation2] sm:$0xff]
    %v417 = vsub.f32 %v416, %v265
    %v418 = vmul.f32 %v417, %v415
    %v419 = vsub.f32 %v418, %v196
    %v420 = vmul.f32 %v419, %v413
    %v421 = vsub.f32 %v420, %v194
    %v422 = vmul.f32 %v421, %v411
    %423 = vst [vmem:[#allocation8] sm:$0xff] %v422
    %424 = vst [vmem:[%s5] sm:$0xff] %v407
    // Predicated region
    $region30: #{lazy_inverse.1} parent=1 // pred_check
      _
    $region31: #{lazy_inverse.1} parent=1 // pred_check_branch
      %426 = sbr.rel (0) target = $region33
    $region32: #{lazy_inverse.1} parent=1 // pred_region
      %s428 = ssub.s32 128, 128
      %429 = vsyncadd [#allocation4], %s428
      %s431 = sshll.u32 [#allocation8], 4
      %s432 = int_to_ptr.vmem [resolvable:$true] %s431
      %434 = dma.vmem_to_hbm [thread:$0]  %s432, 128, %s4, [#allocation4]
    $region33: #{lazy_inverse.1} parent=1 // pred_fallthru
      _
    // Predicated region
    $region34: #{lazy_inverse.1} parent=1 // pred_check
      _
    $region35: #{lazy_inverse.1} parent=1 // pred_check_branch
      %436 = sbr.rel (0) target = $region37
    $region36: #{lazy_inverse.1} parent=1 // pred_region
      _
    $region37: #{lazy_inverse.1} parent=1 // pred_fallthru
      _
    // Predicated region
    $region38: #{lazy_inverse.1} parent=1 // pred_check
      _
    $region39: #{lazy_inverse.1} parent=1 // pred_check_branch
      %438 = sbr.rel (0) target = $region41
    $region40: #{lazy_inverse.1} parent=1 // pred_region
      %439 = dma.done [#allocation4], 128
    $region41: #{lazy_inverse.1} parent=1 // pred_fallthru
      _
    // Predicated region
    $region42: #{lazy_inverse.1} parent=1 // pred_check
      _
    $region43: #{lazy_inverse.1} parent=1 // pred_check_branch
      %441 = sbr.rel (0) target = $region45
    $region44: #{lazy_inverse.1} parent=1 // pred_region
      _
    $region45: #{lazy_inverse.1} parent=1 // pred_fallthru
      _
    %442 = vsyncpa [#allocation3], 1
    %443 = vsyncpa [#allocation6], 1
    %444 = vsyncpa [#allocation4], 1

</llo_original>
